<compile_context>
chip_gen: v7x
topology: tpu7x:2x2x1
jax: 0.10.0
libtpu: 0.0.40
codegen_flags: <defaults>
</compile_context>

<pallas_src>
import functools

import jax
import jax.numpy as jnp
from jax import lax
from jax.experimental import pallas as pl
from jax.experimental.pallas import tpu as pltpu

EPS = 1e-5
LANES = 128


def _round_up(x, m):
    return (x + m - 1) // m * m


# --------------------------- Pallas kernels ---------------------------------
def _conv1_shortcut_kernel(p_ref, w1_ref, w3_ref, s1_ref, b1_ref, s3_ref,
                           b3_ref, out1_ref, res_ref):
    """One M-tile: out1 = relu(BN1(conv1)), residual = BN3(shortcut)."""
    p = p_ref[...]                                            # (tm, k1p) bf16
    acc1 = jnp.dot(p, w1_ref[...], preferred_element_type=jnp.float32)
    out1_ref[...] = jnp.maximum(acc1 * s1_ref[...] + b1_ref[...], 0.0)
    acc3 = jnp.dot(p, w3_ref[...], preferred_element_type=jnp.float32)
    res_ref[...] = acc3 * s3_ref[...] + b3_ref[...]


def _conv2_residual_kernel(x_ref, w2_ref, s2_ref, b2_ref, r_ref, o_ref,
                           acc_ref, *, ho, wo):
    """One image: out = BN2(conv2(out1)) + residual, conv2 as 9 tap matmuls."""
    acc_ref[...] = jnp.zeros_like(acc_ref)
    for t in range(9):                       # static unroll over the 3x3 taps
        di, dj = t // 3, t % 3
        lhs = x_ref[di:di + ho, dj:dj + wo, :]        # (ho, wo, cp) f32 window
        lhs = lhs.reshape(ho * wo, lhs.shape[-1]).astype(jnp.bfloat16)
        acc_ref[...] += jnp.dot(lhs, w2_ref[t],
                                preferred_element_type=jnp.float32)
    o_ref[...] = acc_ref[...] * s2_ref[...] + b2_ref[...] + r_ref[...]


# ------------------------------ glue (JAX) -----------------------------------
def _im2col(x_nhwc, kh, kw, stride, pad):
    xp = jnp.pad(x_nhwc, ((0, 0), (pad, pad), (pad, pad), (0, 0)))
    n, hp, wp, c = xp.shape
    ho = (hp - kh) // stride + 1
    wo = (wp - kw) // stride + 1
    cols = []
    for i in range(kh):
        for j in range(kw):
            cols.append(xp[:, i:i + (ho - 1) * stride + 1:stride,
                           j:j + (wo - 1) * stride + 1:stride, :])
    patches = jnp.concatenate(cols, axis=-1)          # (n, ho, wo, kh*kw*c)
    return patches.reshape(n * ho * wo, kh * kw * c), (n, ho, wo)


def _torch_w_to_mat(w_oihw):
    co, ci, kh, kw = w_oihw.shape
    return jnp.transpose(w_oihw, (2, 3, 1, 0)).reshape(kh * kw * ci, co)


def _bn_fold(gamma, beta, mean, var):
    scale = gamma / jnp.sqrt(var + EPS)
    return scale, beta - mean * scale


# ------------------------- BasicBlock forward --------------------------------
def basic_block_forward(x_nchw, params, *, stride, in_planes, planes,
                        use_batch_norm=True, tile_m=512):
    x = jnp.transpose(x_nchw, (0, 2, 3, 1)).astype(jnp.float32)     # NHWC
    n, h, w, cin = x.shape
    assert cin == in_planes
    assert h % stride == 0 and w % stride == 0
    co = planes
    cp = _round_up(co, LANES)                 # lane-dense (padded) channels
    ho, wo = h // stride, w // stride
    # TODO(synk): kernel 2's in-kernel (ho,wo,cp)->(ho*wo,cp) flatten assumes
    # the output width is a sublane multiple; generalize via width padding.
    assert wo % 8 == 0, "output width must be a multiple of 8"

    # ---- folded BN affines (inference mode), zero-padded to cp lanes -------
    def padded_affine(scale, bias):
        s = jnp.zeros((1, cp), jnp.float32).at[0, :co].set(scale)
        b = jnp.zeros((1, cp), jnp.float32).at[0, :co].set(bias)
        return s, b

    if use_batch_norm:
        s1, b1 = _bn_fold(params['bn1_gamma'], params['bn1_beta'],
                          params['bn1_mean'], params['bn1_var'])
        s2, b2 = _bn_fold(params['bn2_gamma'], params['bn2_beta'],
                          params['bn2_mean'], params['bn2_var'])
    else:
        s1 = s2 = jnp.ones((co,), jnp.float32)
        b1 = b2 = jnp.zeros((co,), jnp.float32)
    s1p, b1p = padded_affine(s1, b1)
    s2p, b2p = padded_affine(s2, b2)

    has_proj = (stride != 1) or (in_planes != planes)
    if has_proj and use_batch_norm:
        s3, b3 = _bn_fold(params['bn3_gamma'], params['bn3_beta'],
                          params['bn3_mean'], params['bn3_var'])
    else:
        s3 = jnp.ones((co,), jnp.float32)
        b3 = jnp.zeros((co,), jnp.float32)
    s3p, b3p = padded_affine(s3, b3)

    # ---- weights: lane/sublane padded, bf16 for the MXU ---------------------
    k1 = 9 * cin
    k1p = _round_up(k1, 8)
    w1_mat = _torch_w_to_mat(params['conv1_w'])                     # (k1, co)
    w1f = jnp.zeros((k1p, cp), jnp.float32).at[:k1, :co].set(w1_mat)
    w1f = w1f.astype(jnp.bfloat16)

    # Shortcut over the SAME conv1 patches: the 1x1 conv (or identity) only
    # reads the centre tap, i.e. patch columns [4*cin, 5*cin).
    w3f = jnp.zeros((k1p, cp), jnp.float32)
    if has_proj:
        w3_mat = _torch_w_to_mat(params['conv3_w'])                 # (cin, co)
        w3f = w3f.at[4 * cin:5 * cin, :co].set(w3_mat)
    else:
        w3f = w3f.at[4 * cin:5 * cin, :cin].set(jnp.eye(cin, dtype=jnp.float32))
    w3f = w3f.astype(jnp.bfloat16)

    w2_mat = jnp.transpose(params['conv2_w'], (2, 3, 1, 0)).reshape(9, co, co)
    w2f = jnp.zeros((9, cp, cp), jnp.float32).at[:, :co, :co].set(w2_mat)
    w2f = w2f.astype(jnp.bfloat16)

    # ---- kernel 1: conv1 + BN1 + ReLU  and  shortcut + BN3 ------------------
    patches, (n_, ho_, wo_) = _im2col(x.astype(jnp.bfloat16), 3, 3, stride, 1)
    assert (n_, ho_, wo_) == (n, ho, wo)
    m1 = n * ho * wo
    tm = min(tile_m, _round_up(m1, 8))
    m1p = _round_up(m1, tm)
    patches = jnp.pad(patches, ((0, m1p - m1), (0, k1p - k1)))

    out1_full, res_full = pl.pallas_call(
        _conv1_shortcut_kernel,
        out_shape=(jax.ShapeDtypeStruct((m1p, cp), jnp.float32),
                   jax.ShapeDtypeStruct((m1p, cp), jnp.float32)),
        grid=(m1p // tm,),
        in_specs=[
            pl.BlockSpec((tm, k1p), lambda i: (i, 0)),        # patch tile
            pl.BlockSpec((k1p, cp), lambda i: (0, 0)),        # w1  (resident)
            pl.BlockSpec((k1p, cp), lambda i: (0, 0)),        # w3  (resident)
            pl.BlockSpec((1, cp), lambda i: (0, 0)),          # s1
            pl.BlockSpec((1, cp), lambda i: (0, 0)),          # b1
            pl.BlockSpec((1, cp), lambda i: (0, 0)),          # s3
            pl.BlockSpec((1, cp), lambda i: (0, 0)),          # b3
        ],
        out_specs=[pl.BlockSpec((tm, cp), lambda i: (i, 0)),
                   pl.BlockSpec((tm, cp), lambda i: (i, 0))],
        compiler_params=pltpu.CompilerParams(
            dimension_semantics=("parallel",)),
    )(patches, w1f, w3f, s1p, b1p, s3p, b3p)

    # ---- kernel 2: conv2 + BN2 + residual add (in-kernel 3x3 taps) ----------
    out1_img = out1_full[:m1].reshape(n, ho, wo, cp)
    out1_img = jnp.pad(out1_img, ((0, 0), (1, 1), (1, 1), (0, 0)))  # halo
    residual = res_full[:m1]
    hp2, wp2 = ho + 2, wo + 2
    hw = ho * wo

    out_flat = pl.pallas_call(
        functools.partial(_conv2_residual_kernel, ho=ho, wo=wo),
        out_shape=jax.ShapeDtypeStruct((m1, cp), jnp.float32),
        grid=(n,),
        in_specs=[
            pl.BlockSpec((None, hp2, wp2, cp), lambda b: (b, 0, 0, 0)),
            pl.BlockSpec((9, cp, cp), lambda b: (0, 0, 0)),   # w2 (resident)
            pl.BlockSpec((1, cp), lambda b: (0, 0)),          # s2
            pl.BlockSpec((1, cp), lambda b: (0, 0)),          # b2
            pl.BlockSpec((hw, cp), lambda b: (b, 0)),         # residual
        ],
        out_specs=pl.BlockSpec((hw, cp), lambda b: (b, 0)),
        scratch_shapes=[pltpu.VMEM((hw, cp), jnp.float32)],
        compiler_params=pltpu.CompilerParams(
            dimension_semantics=("parallel",)),
    )(out1_img, w2f, s2p, b2p, residual)

    out = out_flat[:, :co].reshape(n, ho, wo, co)
    return jnp.transpose(out, (0, 3, 1, 2))                   # back to NCHW


# ------------------------- pure-JAX reference --------------------------------
def ref_forward(x, params, *, stride, in_planes, planes, use_batch_norm=True,
                conv_dtype=jnp.float32):
    def conv(inp, w, s, pad):
        return lax.conv_general_dilated(
            inp.astype(conv_dtype), w.astype(conv_dtype), (s, s),
            [(pad, pad), (pad, pad)],
            dimension_numbers=('NCHW', 'OIHW', 'NCHW'),
            preferred_element_type=jnp.float32)

    def bn(inp, g, b, m, v):
        g, b, m, v = (a[None, :, None, None] for a in (g, b, m, v))
        return (inp - m) / jnp.sqrt(v + EPS) * g + b

    out = conv(x, params['conv1_w'], stride, 1)
    if use_batch_norm:
        out = bn(out, params['bn1_gamma'], params['bn1_beta'],
                 params['bn1_mean'], params['bn1_var'])
    out = jax.nn.relu(out)
    out = conv(out, params['conv2_w'], 1, 1)
    if use_batch_norm:
        out = bn(out, params['bn2_gamma'], params['bn2_beta'],
                 params['bn2_mean'], params['bn2_var'])
    if stride != 1 or in_planes != planes:
        sc = conv(x, params['conv3_w'], stride, 0)
        if use_batch_norm:
            sc = bn(sc, params['bn3_gamma'], params['bn3_beta'],
                    params['bn3_mean'], params['bn3_var'])
    else:
        sc = x
    return out + sc


# --------------------------------- main ---------------------------------------
if __name__ == "__main__":
    in_planes, planes, stride = 4, 8, 2        # exercises the conv3 + bn3 path
    N, H, W = 2, 16, 16

    key = jax.random.PRNGKey(0)
    ks = jax.random.split(key, 6)

    def bn_params(k, c):
        kg, kb, km, kv = jax.random.split(k, 4)
        return (0.5 + jax.random.uniform(kg, (c,), jnp.float32),   # gamma
                0.1 * jax.random.normal(kb, (c,), jnp.float32),    # beta
                0.1 * jax.random.normal(km, (c,), jnp.float32),    # running_mean
                0.5 + jax.random.uniform(kv, (c,), jnp.float32))   # running_var

    g1, be1, rm1, rv1 = bn_params(ks[3], planes)
    g2, be2, rm2, rv2 = bn_params(ks[4], planes)
    g3, be3, rm3, rv3 = bn_params(ks[5], planes)

    params = {
        'conv1_w': 0.1 * jax.random.normal(ks[0], (planes, in_planes, 3, 3), jnp.float32),
        'conv2_w': 0.1 * jax.random.normal(ks[1], (planes, planes, 3, 3), jnp.float32),
        'conv3_w': 0.1 * jax.random.normal(ks[2], (planes, in_planes, 1, 1), jnp.float32),
        'bn1_gamma': g1, 'bn1_beta': be1, 'bn1_mean': rm1, 'bn1_var': rv1,
        'bn2_gamma': g2, 'bn2_beta': be2, 'bn2_mean': rm2, 'bn2_var': rv2,
        'bn3_gamma': g3, 'bn3_beta': be3, 'bn3_mean': rm3, 'bn3_var': rv3,
    }

    x = jax.random.normal(jax.random.PRNGKey(1), (N, in_planes, H, W), jnp.float32)

    out = basic_block_forward(x, params, stride=stride, in_planes=in_planes,
                              planes=planes, use_batch_norm=True)
    out = jax.block_until_ready(out)
    assert out.shape == (N, planes, H // stride, W // stride)

    # apples-to-apples check: reference with the same bf16 matmul inputs.
    ref_bf16 = ref_forward(x, params, stride=stride, in_planes=in_planes,
                           planes=planes, use_batch_norm=True,
                           conv_dtype=jnp.bfloat16)
    assert jnp.allclose(out, ref_bf16, rtol=2e-2, atol=2e-2)

    # sanity check against the pure-f32 module (bf16 MXU => loose tolerance).
    ref_f32 = ref_forward(x, params, stride=stride, in_planes=in_planes,
                          planes=planes, use_batch_norm=True,
                          conv_dtype=jnp.float32)
    assert jnp.allclose(out, ref_f32, rtol=1e-1, atol=1e-1)

    print("KERNEL_OK")
</pallas_src>

<mosaic_0001>
module attributes {stable_mosaic.version = 11 : i64} {
  func.func @_conv1_shortcut_kernel(%arg0: i32, %arg1: memref<128x40xbf16, #tpu.memory_space<vmem>>, %arg2: memref<40x128xbf16, #tpu.memory_space<vmem>>, %arg3: memref<40x128xbf16, #tpu.memory_space<vmem>>, %arg4: memref<1x128xf32, #tpu.memory_space<vmem>>, %arg5: memref<1x128xf32, #tpu.memory_space<vmem>>, %arg6: memref<1x128xf32, #tpu.memory_space<vmem>>, %arg7: memref<1x128xf32, #tpu.memory_space<vmem>>, %arg8: memref<128x128xf32, #tpu.memory_space<vmem>>, %arg9: memref<128x128xf32, #tpu.memory_space<vmem>>) attributes {dimension_semantics = [#tpu.dimension_semantics<parallel>], iteration_bounds = array<i64: 1>, scalar_prefetch = 0 : i64, scratch_operands = 0 : i64, tpu.core_type = #tpu.core_type<tc>, window_params = [{transform_indices = @transform_0, window_bounds = array<i64: 128, 40>}, {pipeline_mode = #tpu.pipeline_mode<synchronous>, transform_indices = @transform_1, window_bounds = array<i64: 40, 128>}, {pipeline_mode = #tpu.pipeline_mode<synchronous>, transform_indices = @transform_2, window_bounds = array<i64: 40, 128>}, {pipeline_mode = #tpu.pipeline_mode<synchronous>, transform_indices = @transform_3, window_bounds = array<i64: 1, 128>}, {pipeline_mode = #tpu.pipeline_mode<synchronous>, transform_indices = @transform_4, window_bounds = array<i64: 1, 128>}, {pipeline_mode = #tpu.pipeline_mode<synchronous>, transform_indices = @transform_5, window_bounds = array<i64: 1, 128>}, {pipeline_mode = #tpu.pipeline_mode<synchronous>, transform_indices = @transform_6, window_bounds = array<i64: 1, 128>}, {transform_indices = @transform_7, window_bounds = array<i64: 128, 128>}, {transform_indices = @transform_8, window_bounds = array<i64: 128, 128>}]} {
    %c0 = arith.constant 0 : index
    %c0_0 = arith.constant 0 : index
    %0 = vector.load %arg1[%c0, %c0_0] : memref<128x40xbf16, #tpu.memory_space<vmem>>, vector<128x40xbf16>
    %c0_1 = arith.constant 0 : index
    %c0_2 = arith.constant 0 : index
    %1 = vector.load %arg2[%c0_1, %c0_2] : memref<40x128xbf16, #tpu.memory_space<vmem>>, vector<40x128xbf16>
    %cst = arith.constant dense<0.000000e+00> : vector<128x128xf32>
    %2 = tpu.matmul %0, %1, %cst {dimension_numbers = #tpu.dot_dimension_numbers<[1], [0], [0], [1], [0, 0, 1, 1], [], []>} : vector<128x40xbf16>, vector<40x128xbf16>, vector<128x128xf32> -> vector<128x128xf32>
    %c0_3 = arith.constant 0 : index
    %c0_4 = arith.constant 0 : index
    %3 = vector.load %arg4[%c0_3, %c0_4] : memref<1x128xf32, #tpu.memory_space<vmem>>, vector<1x128xf32>
    %4 = vector.broadcast %3 : vector<1x128xf32> to vector<128x128xf32>
    %5 = arith.mulf %2, %4 : vector<128x128xf32>
    %c0_5 = arith.constant 0 : index
    %c0_6 = arith.constant 0 : index
    %6 = vector.load %arg5[%c0_5, %c0_6] : memref<1x128xf32, #tpu.memory_space<vmem>>, vector<1x128xf32>
    %7 = vector.broadcast %6 : vector<1x128xf32> to vector<128x128xf32>
    %8 = arith.addf %5, %7 : vector<128x128xf32>
    %cst_7 = arith.constant 0.000000e+00 : f32
    %9 = vector.broadcast %cst_7 : f32 to vector<128x128xf32>
    %10 = arith.maximumf %8, %9 : vector<128x128xf32>
    %c0_8 = arith.constant 0 : index
    %c0_9 = arith.constant 0 : index
    %11 = vector.load %arg8[%c0_8, %c0_9] : memref<128x128xf32, #tpu.memory_space<vmem>>, vector<128x128xf32>
    tpu.vector_store %arg8[%c0_8, %c0_9], %10 {strides = array<i32>} : memref<128x128xf32, #tpu.memory_space<vmem>>, vector<128x128xf32>,
    %c0_10 = arith.constant 0 : index
    %c0_11 = arith.constant 0 : index
    %12 = vector.load %arg3[%c0_10, %c0_11] : memref<40x128xbf16, #tpu.memory_space<vmem>>, vector<40x128xbf16>
    %cst_12 = arith.constant dense<0.000000e+00> : vector<128x128xf32>
    %13 = tpu.matmul %0, %12, %cst_12 {dimension_numbers = #tpu.dot_dimension_numbers<[1], [0], [0], [1], [0, 0, 1, 1], [], []>} : vector<128x40xbf16>, vector<40x128xbf16>, vector<128x128xf32> -> vector<128x128xf32>
    %c0_13 = arith.constant 0 : index
    %c0_14 = arith.constant 0 : index
    %14 = vector.load %arg6[%c0_13, %c0_14] : memref<1x128xf32, #tpu.memory_space<vmem>>, vector<1x128xf32>
    %15 = vector.broadcast %14 : vector<1x128xf32> to vector<128x128xf32>
    %16 = arith.mulf %13, %15 : vector<128x128xf32>
    %c0_15 = arith.constant 0 : index
    %c0_16 = arith.constant 0 : index
    %17 = vector.load %arg7[%c0_15, %c0_16] : memref<1x128xf32, #tpu.memory_space<vmem>>, vector<1x128xf32>
    %18 = vector.broadcast %17 : vector<1x128xf32> to vector<128x128xf32>
    %19 = arith.addf %16, %18 : vector<128x128xf32>
    %c0_17 = arith.constant 0 : index
    %c0_18 = arith.constant 0 : index
    %20 = vector.load %arg9[%c0_17, %c0_18] : memref<128x128xf32, #tpu.memory_space<vmem>>, vector<128x128xf32>
    tpu.vector_store %arg9[%c0_17, %c0_18], %19 {strides = array<i32>} : memref<128x128xf32, #tpu.memory_space<vmem>>, vector<128x128xf32>,
    return
  }
  func.func @transform_0(%arg0: i32) -> (i32, i32) {
    %c0_i32 = arith.constant 0 : i32
    %c0_i32_0 = arith.constant 0 : i32
    return %arg0, %c0_i32 : i32, i32
  }
  func.func @transform_1(%arg0: i32) -> (i32, i32) {
    %c0_i32 = arith.constant 0 : i32
    %c0_i32_0 = arith.constant 0 : i32
    %c0_i32_1 = arith.constant 0 : i32
    return %c0_i32, %c0_i32_0 : i32, i32
  }
  func.func @transform_2(%arg0: i32) -> (i32, i32) {
    %c0_i32 = arith.constant 0 : i32
    %c0_i32_0 = arith.constant 0 : i32
    %c0_i32_1 = arith.constant 0 : i32
    return %c0_i32, %c0_i32_0 : i32, i32
  }
  func.func @transform_3(%arg0: i32) -> (i32, i32) {
    %c0_i32 = arith.constant 0 : i32
    %c0_i32_0 = arith.constant 0 : i32
    %c0_i32_1 = arith.constant 0 : i32
    return %c0_i32, %c0_i32_0 : i32, i32
  }
  func.func @transform_4(%arg0: i32) -> (i32, i32) {
    %c0_i32 = arith.constant 0 : i32
    %c0_i32_0 = arith.constant 0 : i32
    %c0_i32_1 = arith.constant 0 : i32
    return %c0_i32, %c0_i32_0 : i32, i32
  }
  func.func @transform_5(%arg0: i32) -> (i32, i32) {
    %c0_i32 = arith.constant 0 : i32
    %c0_i32_0 = arith.constant 0 : i32
    %c0_i32_1 = arith.constant 0 : i32
    return %c0_i32, %c0_i32_0 : i32, i32
  }
  func.func @transform_6(%arg0: i32) -> (i32, i32) {
    %c0_i32 = arith.constant 0 : i32
    %c0_i32_0 = arith.constant 0 : i32
    %c0_i32_1 = arith.constant 0 : i32
    return %c0_i32, %c0_i32_0 : i32, i32
  }
  func.func @transform_7(%arg0: i32) -> (i32, i32) {
    %c0_i32 = arith.constant 0 : i32
    %c0_i32_0 = arith.constant 0 : i32
    return %arg0, %c0_i32 : i32, i32
  }
  func.func @transform_8(%arg0: i32) -> (i32, i32) {
    %c0_i32 = arith.constant 0 : i32
    %c0_i32_0 = arith.constant 0 : i32
    return %arg0, %c0_i32 : i32, i32
  }
}

</mosaic_0001>

<llo_original>
// kernel: tpu_custom_call.1
$region0: #{tpu_custom_call.1}
  #allocation0 [shape = 'u32[]', space=smem, size = 0x4, offset = 0x4, fixed_abs, tag = 'smem constant byte address 0x4 - core index']
  #allocation1 [shape = 'u32[144,128]{1,0:T(1,128)}', space=vmem, size = 0x12000, scoped, tag = 'internal scratch']
  %s0 = inlined_call_operand.vmem [shape: bf16[128,40], index: 0, kind: input, shape index: {}]
  %s1 = inlined_call_operand.vmem [shape: bf16[40,128], index: 1, kind: input, shape index: {}]
  %s2 = inlined_call_operand.vmem [shape: bf16[40,128], index: 2, kind: input, shape index: {}]
  %s3 = inlined_call_operand.vmem [shape: f32[1,128], index: 3, kind: input, shape index: {}]
  %s4 = inlined_call_operand.vmem [shape: f32[1,128], index: 4, kind: input, shape index: {}]
  %s5 = inlined_call_operand.vmem [shape: f32[1,128], index: 5, kind: input, shape index: {}]
  %s6 = inlined_call_operand.vmem [shape: f32[1,128], index: 6, kind: input, shape index: {}]
  %s7 = inlined_call_operand.hbm [shape: f32[128,128], index: 7, kind: output, shape index: {0}]
  %s8 = inlined_call_operand.hbm [shape: f32[128,128], index: 8, kind: output, shape index: {1}]
  %9 = xla_tuple %s7, %s8
  %s10 = sld [smem:[#allocation0]]
  $region46: #{tpu_custom_call.1} parent=0
    _
  %s12 = ssub.s32 1, %s10
  %s13 = scalar_select 0, %s12, %s10
  $region1: #{tpu_custom_call.1} parent=0
    #allocation2 [shape = 'u8[65536]{0}', space=vmem, size = 0x10000, scoped, tag = 'output window, operand 0, single buffered']
    #allocation3 [shape = 's32[1]{0}', space=sflag, size = 0x4, scoped, tag = 'scoped memory for tpu_custom_call.1']
    #allocation4 [shape = 'u8[65536]{0}', space=vmem, size = 0x10000, scoped, tag = 'output window, operand 1, single buffered']
    #allocation5 [shape = 's32[1]{0}', space=sflag, size = 0x4, scoped, tag = 'scoped memory for tpu_custom_call.1']
    %14 = vsyncpa [#allocation3], 0
    %15 = vsyncpa [#allocation5], 0
    // Predicated region
    $region2: #{tpu_custom_call.1} parent=1 // pred_check
      _
    $region3: #{tpu_custom_call.1} parent=1 // pred_check_branch
      %17 = sbr.rel (0) target = $region5
    $region4: #{tpu_custom_call.1} parent=1 // pred_region
      _
    $region5: #{tpu_custom_call.1} parent=1 // pred_fallthru
      _
    // Predicated region
    $region6: #{tpu_custom_call.1} parent=1 // pred_check
      _
    $region7: #{tpu_custom_call.1} parent=1 // pred_check_branch
      %19 = sbr.rel (0) target = $region9
    $region8: #{tpu_custom_call.1} parent=1 // pred_region
      _
    $region9: #{tpu_custom_call.1} parent=1 // pred_fallthru
      _
    // Predicated region
    $region10: #{tpu_custom_call.1} parent=1 // pred_check
      _
    $region11: #{tpu_custom_call.1} parent=1 // pred_check_branch
      %21 = sbr.rel (0) target = $region13
    $region12: #{tpu_custom_call.1} parent=1 // pred_region
      _
    $region13: #{tpu_custom_call.1} parent=1 // pred_fallthru
      _
    // Predicated region
    $region14: #{tpu_custom_call.1} parent=1 // pred_check
      _
    $region15: #{tpu_custom_call.1} parent=1 // pred_check_branch
      %23 = sbr.rel (0) target = $region17
    $region16: #{tpu_custom_call.1} parent=1 // pred_region
      _
    $region17: #{tpu_custom_call.1} parent=1 // pred_fallthru
      _
    // Predicated region
    $region18: #{tpu_custom_call.1} parent=1 // pred_check
      _
    $region19: #{tpu_custom_call.1} parent=1 // pred_check_branch
      %25 = sbr.rel (0) target = $region21
    $region20: #{tpu_custom_call.1} parent=1 // pred_region
      _
    $region21: #{tpu_custom_call.1} parent=1 // pred_fallthru
      _
    // Predicated region
    $region22: #{tpu_custom_call.1} parent=1 // pred_check
      _
    $region23: #{tpu_custom_call.1} parent=1 // pred_check_branch
      %27 = sbr.rel (0) target = $region25
    $region24: #{tpu_custom_call.1} parent=1 // pred_region
      _
    $region25: #{tpu_custom_call.1} parent=1 // pred_fallthru
      _
    // Predicated region
    $region26: #{tpu_custom_call.1} parent=1 // pred_check
      _
    $region27: #{tpu_custom_call.1} parent=1 // pred_check_branch
      %29 = sbr.rel (0) target = $region29
    $region28: #{tpu_custom_call.1} parent=1 // pred_region
      _
    $region29: #{tpu_custom_call.1} parent=1 // pred_fallthru
      _
    %v31 = vld [vmem:[%s0] sm:$0xf]
    %v32 = vld [vmem:[%s0 + $0x4] sm:$0xf]
    %v33 = vld [vmem:[%s0 + $0x8] sm:$0xf]
    %v34 = vld [vmem:[%s0 + $0xc] sm:$0xf]
    %v35 = vld [vmem:[%s0 + $0x10] sm:$0xf]
    %v36 = vld [vmem:[%s0 + $0x14] sm:$0xf]
    %v37 = vld [vmem:[%s0 + $0x18] sm:$0xf]
    %v38 = vld [vmem:[%s0 + $0x1c] sm:$0xf]
    %v39 = vld [vmem:[%s0 + $0x20] sm:$0xf]
    %v40 = vld [vmem:[%s0 + $0x24] sm:$0xf]
    %v41 = vld [vmem:[%s0 + $0x28] sm:$0xf]
    %v42 = vld [vmem:[%s0 + $0x2c] sm:$0xf]
    %v43 = vld [vmem:[%s0 + $0x30] sm:$0xf]
    %v44 = vld [vmem:[%s0 + $0x34] sm:$0xf]
    %v45 = vld [vmem:[%s0 + $0x38] sm:$0xf]
    %v46 = vld [vmem:[%s0 + $0x3c] sm:$0xf]
    %v47 = vld [vmem:[%s1] sm:$0xf]
    %v48 = vld [vmem:[%s1 + $0x4] sm:$0xf]
    %v49 = vld [vmem:[%s1 + $0x8] sm:$0xf]
    %v50 = vld [vmem:[%s1 + $0xc] sm:$0xf]
    %v51 = vld [vmem:[%s1 + $0x10] sm:$0xf]
    %v68 = vunpack.c.l.b16 %v31
    %v69 = vunpack.c.l.b16 %v32
    %v70 = vunpack.c.l.b16 %v33
    %v71 = vunpack.c.l.b16 %v34
    %v72 = vunpack.c.l.b16 %v35
    %v73 = vunpack.c.l.b16 %v36
    %v74 = vunpack.c.l.b16 %v37
    %v75 = vunpack.c.l.b16 %v38
    %v76 = vunpack.c.l.b16 %v39
    %v77 = vunpack.c.l.b16 %v40
    %v78 = vunpack.c.l.b16 %v41
    %v79 = vunpack.c.l.b16 %v42
    %v80 = vunpack.c.l.b16 %v43
    %v81 = vunpack.c.l.b16 %v44
    %v82 = vunpack.c.l.b16 %v45
    %v83 = vunpack.c.l.b16 %v46
    %v84 = vpack.c.b16 %v69, %v68
    %v85 = vpack.c.b16 %v71, %v70
    %v86 = vpack.c.b16 %v73, %v72
    %v87 = vpack.c.b16 %v75, %v74
    %v88 = vpack.c.b16 %v77, %v76
    %v89 = vpack.c.b16 %v79, %v78
    %v90 = vpack.c.b16 %v81, %v80
    %v91 = vpack.c.b16 %v83, %v82
    %v97 = vunpack.c.l.b16 %v47
    %v98 = vunpack.c.l.b16 %v48
    %v99 = vunpack.c.l.b16 %v49
    %v100 = vunpack.c.l.b16 %v50
    %v101 = vunpack.c.l.b16 %v51
    %v102 = vpack.c.b16 %v98, %v97
    %v103 = vpack.c.b16 %v100, %v99
    %v104 = vpack.c.b16 %v101, %v101
    %vm107 = vcmask 326656
    %v109 = vsel %vm107, %v84, 0
    %v112 = vsel %vm107, %v85, 0
    %v115 = vsel %vm107, %v86, 0
    %v118 = vsel %vm107, %v87, 0
    %v121 = vsel %vm107, %v88, 0
    %v124 = vsel %vm107, %v89, 0
    %v127 = vsel %vm107, %v90, 0
    %v130 = vsel %vm107, %v91, 0
    %vm132 = vcmask 1043456
    %v134 = vsel %vm132, %v104, 0
    %136 = vmatprep.subr.bf16.mxu0 0
    %137 = vmatpush1.bf16.msra.mxu0 %v102
    %138 = vmatprep.subr.bf16.mxu0 0
    %139 = vmatpush1.bf16.msra.mxu0 %v103
    %140 = vmatprep.subr.bf16.mxu0 0
    %141 = vmatpush1.bf16.msra.mxu0 %v134
    %142 = vmatprep.subr.bf16.mxu0 0
    %143 = vmatpush1.bf16.msra.mxu0 0
    %144 = vmatprep.subr.bf16.mxu0 0
    %145 = vmatpush1.bf16.msra.mxu0 0
    %146 = vmatprep.subr.bf16.mxu0 0
    %147 = vmatpush1.bf16.msra.mxu0 0
    %148 = vmatprep.subr.bf16.mxu0 0
    %149 = vmatpush1.bf16.msra.mxu0 0
    %150 = vmatprep.subr.bf16.mxu0 0
    %151 = vmatpush1.bf16.msra.mxu0 0
    %152 = vmatprep.subr.bf16.mxu0 0
    %153 = vmatpush1.bf16.msra.mxu0 0
    %154 = vmatprep.subr.bf16.mxu0 0
    %155 = vmatpush1.bf16.msra.mxu0 0
    %156 = vmatprep.subr.bf16.mxu0 0
    %157 = vmatpush1.bf16.msra.mxu0 0
    %158 = vmatprep.subr.bf16.mxu0 0
    %159 = vmatpush1.bf16.msra.mxu0 0
    %160 = vmatprep.subr.bf16.mxu0 0
    %161 = vmatpush1.bf16.msra.mxu0 0
    %162 = vmatprep.subr.bf16.mxu0 0
    %163 = vmatpush1.bf16.msra.mxu0 0
    %164 = vmatprep.subr.bf16.mxu0 0
    %165 = vmatpush1.bf16.msra.mxu0 0
    %166 = vmatprep.subr.bf16.mxu0 0
    %167 = vmatpush1.bf16.msra.mxu0 0
    %168 = vmatprep.mubr.bf16.mxu0 0
    %169 = vmatmul.mubr.bf16.gmra.mrb[0].mxu0 %v109
    %v170 = vpop.f32.mrb[0].mxu0
    %v171 = vadd.f32 0.0, %v170
    %v172 = vpop.f32.mrb[0].mxu0
    %v173 = vpop.f32.mrb[0].mxu0
    %v174 = vadd.f32 0.0, %v173
    %v175 = vpop.f32.mrb[0].mxu0
    %176 = vmatprep.mubr.bf16.mxu0 0
    %177 = vmatmul.mubr.bf16.gmra.mrb[0].mxu0 %v112
    %v178 = vpop.f32.mrb[0].mxu0
    %v179 = vadd.f32 0.0, %v178
    %v180 = vpop.f32.mrb[0].mxu0
    %v181 = vpop.f32.mrb[0].mxu0
    %v182 = vadd.f32 0.0, %v181
    %v183 = vpop.f32.mrb[0].mxu0
    %184 = vmatprep.mubr.bf16.mxu0 0
    %185 = vmatmul.mubr.bf16.gmra.mrb[0].mxu0 %v115
    %v186 = vpop.f32.mrb[0].mxu0
    %v187 = vadd.f32 0.0, %v186
    %v188 = vpop.f32.mrb[0].mxu0
    %v189 = vpop.f32.mrb[0].mxu0
    %v190 = vadd.f32 0.0, %v189
    %v191 = vpop.f32.mrb[0].mxu0
    %192 = vmatprep.mubr.bf16.mxu0 0
    %193 = vmatmul.mubr.bf16.gmra.mrb[0].mxu0 %v118
    %v194 = vpop.f32.mrb[0].mxu0
    %v195 = vadd.f32 0.0, %v194
    %v196 = vpop.f32.mrb[0].mxu0
    %v197 = vpop.f32.mrb[0].mxu0
    %v198 = vadd.f32 0.0, %v197
    %v199 = vpop.f32.mrb[0].mxu0
    %200 = vmatprep.mubr.bf16.mxu0 0
    %201 = vmatmul.mubr.bf16.gmra.mrb[0].mxu0 %v121
    %v202 = vpop.f32.mrb[0].mxu0
    %v203 = vadd.f32 0.0, %v202
    %v204 = vpop.f32.mrb[0].mxu0
    %v205 = vpop.f32.mrb[0].mxu0
    %v206 = vadd.f32 0.0, %v205
    %v207 = vpop.f32.mrb[0].mxu0
    %208 = vmatprep.mubr.bf16.mxu0 0
    %209 = vmatmul.mubr.bf16.gmra.mrb[0].mxu0 %v124
    %v210 = vpop.f32.mrb[0].mxu0
    %v211 = vadd.f32 0.0, %v210
    %v212 = vpop.f32.mrb[0].mxu0
    %v213 = vpop.f32.mrb[0].mxu0
    %v214 = vadd.f32 0.0, %v213
    %v215 = vpop.f32.mrb[0].mxu0
    %216 = vmatprep.mubr.bf16.mxu0 0
    %217 = vmatmul.mubr.bf16.gmra.mrb[0].mxu0 %v127
    %v218 = vpop.f32.mrb[0].mxu0
    %v219 = vadd.f32 0.0, %v218
    %v220 = vpop.f32.mrb[0].mxu0
    %v221 = vpop.f32.mrb[0].mxu0
    %v222 = vadd.f32 0.0, %v221
    %v223 = vpop.f32.mrb[0].mxu0
    %224 = vmatprep.mubr.bf16.mxu0 0
    %225 = vmatmul.mubr.bf16.gmra.mrb[0].mxu0 %v130
    %v226 = vpop.f32.mrb[0].mxu0
    %v227 = vadd.f32 0.0, %v226
    %v228 = vpop.f32.mrb[0].mxu0
    %v229 = vpop.f32.mrb[0].mxu0
    %v230 = vadd.f32 0.0, %v229
    %v231 = vpop.f32.mrb[0].mxu0
    %232 = vdwg.mxu0
    %v233 = vld [vmem:[%s3] sm:$0x1]
    %v235 = vlaneseq
    %v236 = vshrl.u32 %v235, 7
    %v237 = vsub.s32 0, %v236
    %v238 = vrot.slane %v233, %v237
    %v240 = vmul.f32 %v171, %v238
    %v241 = vmul.f32 %v174, %v238
    %v242 = vmul.f32 %v179, %v238
    %v243 = vmul.f32 %v182, %v238
    %v244 = vmul.f32 %v187, %v238
    %v245 = vmul.f32 %v190, %v238
    %v246 = vmul.f32 %v195, %v238
    %v247 = vmul.f32 %v198, %v238
    %v248 = vmul.f32 %v203, %v238
    %v249 = vmul.f32 %v206, %v238
    %v250 = vmul.f32 %v211, %v238
    %v251 = vmul.f32 %v214, %v238
    %v252 = vmul.f32 %v219, %v238
    %v253 = vmul.f32 %v222, %v238
    %v254 = vmul.f32 %v227, %v238
    %v255 = vmul.f32 %v230, %v238
    %v256 = vld [vmem:[%s4] sm:$0x1]
    %v258 = vlaneseq
    %v259 = vshrl.u32 %v258, 7
    %v260 = vsub.s32 0, %v259
    %v261 = vrot.slane %v256, %v260
    %v263 = vadd.f32 %v240, %v261
    %v264 = vadd.f32 %v241, %v261
    %v265 = vadd.f32 %v242, %v261
    %v266 = vadd.f32 %v243, %v261
    %v267 = vadd.f32 %v244, %v261
    %v268 = vadd.f32 %v245, %v261
    %v269 = vadd.f32 %v246, %v261
    %v270 = vadd.f32 %v247, %v261
    %v271 = vadd.f32 %v248, %v261
    %v272 = vadd.f32 %v249, %v261
    %v273 = vadd.f32 %v250, %v261
    %v274 = vadd.f32 %v251, %v261
    %v275 = vadd.f32 %v252, %v261
    %v276 = vadd.f32 %v253, %v261
    %v277 = vadd.f32 %v254, %v261
    %v278 = vadd.f32 %v255, %v261
    %v279 = vmax.f32 %v263, 0.0
    %v280 = vmax.f32 %v264, 0.0
    %v281 = vmax.f32 %v265, 0.0
    %v282 = vmax.f32 %v266, 0.0
    %v283 = vmax.f32 %v267, 0.0
    %v284 = vmax.f32 %v268, 0.0
    %v285 = vmax.f32 %v269, 0.0
    %v286 = vmax.f32 %v270, 0.0
    %v287 = vmax.f32 %v271, 0.0
    %v288 = vmax.f32 %v272, 0.0
    %v289 = vmax.f32 %v273, 0.0
    %v290 = vmax.f32 %v274, 0.0
    %v291 = vmax.f32 %v275, 0.0
    %v292 = vmax.f32 %v276, 0.0
    %v293 = vmax.f32 %v277, 0.0
    %v294 = vmax.f32 %v278, 0.0
    %295 = vst [vmem:[#allocation2] sm:$0xff] %v279
    %296 = vst [vmem:[#allocation2 + $0x8] sm:$0xff] %v280
    %297 = vst [vmem:[#allocation2 + $0x10] sm:$0xff] %v281
    %298 = vst [vmem:[#allocation2 + $0x18] sm:$0xff] %v282
    %299 = vst [vmem:[#allocation2 + $0x20] sm:$0xff] %v283
    %300 = vst [vmem:[#allocation2 + $0x28] sm:$0xff] %v284
    %301 = vst [vmem:[#allocation2 + $0x30] sm:$0xff] %v285
    %302 = vst [vmem:[#allocation2 + $0x38] sm:$0xff] %v286
    %303 = vst [vmem:[#allocation2 + $0x40] sm:$0xff] %v287
    %304 = vst [vmem:[#allocation2 + $0x48] sm:$0xff] %v288
    %305 = vst [vmem:[#allocation2 + $0x50] sm:$0xff] %v289
    %306 = vst [vmem:[#allocation2 + $0x58] sm:$0xff] %v290
    %307 = vst [vmem:[#allocation2 + $0x60] sm:$0xff] %v291
    %308 = vst [vmem:[#allocation2 + $0x68] sm:$0xff] %v292
    %309 = vst [vmem:[#allocation2 + $0x70] sm:$0xff] %v293
    %310 = vst [vmem:[#allocation2 + $0x78] sm:$0xff] %v294
    %v311 = vld [vmem:[%s2] sm:$0xf]
    %v312 = vld [vmem:[%s2 + $0x4] sm:$0xf]
    %v313 = vld [vmem:[%s2 + $0x8] sm:$0xf]
    %v314 = vld [vmem:[%s2 + $0xc] sm:$0xf]
    %v315 = vld [vmem:[%s2 + $0x10] sm:$0xf]
    %v321 = vunpack.c.l.b16 %v311
    %v322 = vunpack.c.l.b16 %v312
    %v323 = vunpack.c.l.b16 %v313
    %v324 = vunpack.c.l.b16 %v314
    %v325 = vunpack.c.l.b16 %v315
    %v326 = vpack.c.b16 %v322, %v321
    %v327 = vpack.c.b16 %v324, %v323
    %v328 = vpack.c.b16 %v325, %v325
    %v332 = vsel %vm132, %v328, 0
    %334 = vmatprep.subr.bf16.mxu0 0
    %335 = vmatpush1.bf16.msra.mxu0 %v326
    %336 = vmatprep.subr.bf16.mxu0 0
    %337 = vmatpush1.bf16.msra.mxu0 %v327
    %338 = vmatprep.subr.bf16.mxu0 0
    %339 = vmatpush1.bf16.msra.mxu0 %v332
    %340 = vmatprep.subr.bf16.mxu0 0
    %341 = vmatpush1.bf16.msra.mxu0 0
    %342 = vmatprep.subr.bf16.mxu0 0
    %343 = vmatpush1.bf16.msra.mxu0 0
    %344 = vmatprep.subr.bf16.mxu0 0
    %345 = vmatpush1.bf16.msra.mxu0 0
    %346 = vmatprep.subr.bf16.mxu0 0
    %347 = vmatpush1.bf16.msra.mxu0 0
    %348 = vmatprep.subr.bf16.mxu0 0
    %349 = vmatpush1.bf16.msra.mxu0 0
    %350 = vmatprep.subr.bf16.mxu0 0
    %351 = vmatpush1.bf16.msra.mxu0 0
    %352 = vmatprep.subr.bf16.mxu0 0
    %353 = vmatpush1.bf16.msra.mxu0 0
    %354 = vmatprep.subr.bf16.mxu0 0
    %355 = vmatpush1.bf16.msra.mxu0 0
    %356 = vmatprep.subr.bf16.mxu0 0
    %357 = vmatpush1.bf16.msra.mxu0 0
    %358 = vmatprep.subr.bf16.mxu0 0
    %359 = vmatpush1.bf16.msra.mxu0 0
    %360 = vmatprep.subr.bf16.mxu0 0
    %361 = vmatpush1.bf16.msra.mxu0 0
    %362 = vmatprep.subr.bf16.mxu0 0
    %363 = vmatpush1.bf16.msra.mxu0 0
    %364 = vmatprep.subr.bf16.mxu0 0
    %365 = vmatpush1.bf16.msra.mxu0 0
    %366 = vmatprep.mubr.bf16.mxu0 0
    %367 = vmatmul.mubr.bf16.gmra.mrb[0].mxu0 %v109
    %v368 = vpop.f32.mrb[0].mxu0
    %v369 = vadd.f32 0.0, %v368
    %v370 = vpop.f32.mrb[0].mxu0
    %v371 = vpop.f32.mrb[0].mxu0
    %v372 = vadd.f32 0.0, %v371
    %v373 = vpop.f32.mrb[0].mxu0
    %374 = vmatprep.mubr.bf16.mxu0 0
    %375 = vmatmul.mubr.bf16.gmra.mrb[0].mxu0 %v112
    %v376 = vpop.f32.mrb[0].mxu0
    %v377 = vadd.f32 0.0, %v376
    %v378 = vpop.f32.mrb[0].mxu0
    %v379 = vpop.f32.mrb[0].mxu0
    %v380 = vadd.f32 0.0, %v379
    %v381 = vpop.f32.mrb[0].mxu0
    %382 = vmatprep.mubr.bf16.mxu0 0
    %383 = vmatmul.mubr.bf16.gmra.mrb[0].mxu0 %v115
    %v384 = vpop.f32.mrb[0].mxu0
    %v385 = vadd.f32 0.0, %v384
    %v386 = vpop.f32.mrb[0].mxu0
    %v387 = vpop.f32.mrb[0].mxu0
    %v388 = vadd.f32 0.0, %v387
    %v389 = vpop.f32.mrb[0].mxu0
    %390 = vmatprep.mubr.bf16.mxu0 0
    %391 = vmatmul.mubr.bf16.gmra.mrb[0].mxu0 %v118
    %v392 = vpop.f32.mrb[0].mxu0
    %v393 = vadd.f32 0.0, %v392
    %v394 = vpop.f32.mrb[0].mxu0
    %v395 = vpop.f32.mrb[0].mxu0
    %v396 = vadd.f32 0.0, %v395
    %v397 = vpop.f32.mrb[0].mxu0
    %398 = vmatprep.mubr.bf16.mxu0 0
    %399 = vmatmul.mubr.bf16.gmra.mrb[0].mxu0 %v121
    %v400 = vpop.f32.mrb[0].mxu0
    %v401 = vadd.f32 0.0, %v400
    %v402 = vpop.f32.mrb[0].mxu0
    %v403 = vpop.f32.mrb[0].mxu0
    %v404 = vadd.f32 0.0, %v403
    %v405 = vpop.f32.mrb[0].mxu0
    %406 = vmatprep.mubr.bf16.mxu0 0
    %407 = vmatmul.mubr.bf16.gmra.mrb[0].mxu0 %v124
    %v408 = vpop.f32.mrb[0].mxu0
    %v409 = vadd.f32 0.0, %v408
    %v410 = vpop.f32.mrb[0].mxu0
    %v411 = vpop.f32.mrb[0].mxu0
    %v412 = vadd.f32 0.0, %v411
    %v413 = vpop.f32.mrb[0].mxu0
    %414 = vmatprep.mubr.bf16.mxu0 0
    %415 = vmatmul.mubr.bf16.gmra.mrb[0].mxu0 %v127
    %v416 = vpop.f32.mrb[0].mxu0
    %v417 = vadd.f32 0.0, %v416
    %v418 = vpop.f32.mrb[0].mxu0
    %v419 = vpop.f32.mrb[0].mxu0
    %v420 = vadd.f32 0.0, %v419
    %v421 = vpop.f32.mrb[0].mxu0
    %422 = vmatprep.mubr.bf16.mxu0 0
    %423 = vmatmul.mubr.bf16.gmra.mrb[0].mxu0 %v130
    %v424 = vpop.f32.mrb[0].mxu0
    %v425 = vadd.f32 0.0, %v424
    %v426 = vpop.f32.mrb[0].mxu0
    %v427 = vpop.f32.mrb[0].mxu0
    %v428 = vadd.f32 0.0, %v427
    %v429 = vpop.f32.mrb[0].mxu0
    %430 = vdwg.mxu0
    %v431 = vld [vmem:[%s5] sm:$0x1]
    %v433 = vlaneseq
    %v434 = vshrl.u32 %v433, 7
    %v435 = vsub.s32 0, %v434
    %v436 = vrot.slane %v431, %v435
    %v438 = vmul.f32 %v369, %v436
    %v439 = vmul.f32 %v372, %v436
    %v440 = vmul.f32 %v377, %v436
    %v441 = vmul.f32 %v380, %v436
    %v442 = vmul.f32 %v385, %v436
    %v443 = vmul.f32 %v388, %v436
    %v444 = vmul.f32 %v393, %v436
    %v445 = vmul.f32 %v396, %v436
    %v446 = vmul.f32 %v401, %v436
    %v447 = vmul.f32 %v404, %v436
    %v448 = vmul.f32 %v409, %v436
    %v449 = vmul.f32 %v412, %v436
    %v450 = vmul.f32 %v417, %v436
    %v451 = vmul.f32 %v420, %v436
    %v452 = vmul.f32 %v425, %v436
    %v453 = vmul.f32 %v428, %v436
    %v454 = vld [vmem:[%s6] sm:$0x1]
    %v456 = vlaneseq
    %v457 = vshrl.u32 %v456, 7
    %v458 = vsub.s32 0, %v457
    %v459 = vrot.slane %v454, %v458
    %v461 = vadd.f32 %v438, %v459
    %v462 = vadd.f32 %v439, %v459
    %v463 = vadd.f32 %v440, %v459
    %v464 = vadd.f32 %v441, %v459
    %v465 = vadd.f32 %v442, %v459
    %v466 = vadd.f32 %v443, %v459
    %v467 = vadd.f32 %v444, %v459
    %v468 = vadd.f32 %v445, %v459
    %v469 = vadd.f32 %v446, %v459
    %v470 = vadd.f32 %v447, %v459
    %v471 = vadd.f32 %v448, %v459
    %v472 = vadd.f32 %v449, %v459
    %v473 = vadd.f32 %v450, %v459
    %v474 = vadd.f32 %v451, %v459
    %v475 = vadd.f32 %v452, %v459
    %v476 = vadd.f32 %v453, %v459
    %477 = vst [vmem:[#allocation4] sm:$0xff] %v461
    %478 = vst [vmem:[#allocation4 + $0x8] sm:$0xff] %v462
    %479 = vst [vmem:[#allocation4 + $0x10] sm:$0xff] %v463
    %480 = vst [vmem:[#allocation4 + $0x18] sm:$0xff] %v464
    %481 = vst [vmem:[#allocation4 + $0x20] sm:$0xff] %v465
    %482 = vst [vmem:[#allocation4 + $0x28] sm:$0xff] %v466
    %483 = vst [vmem:[#allocation4 + $0x30] sm:$0xff] %v467
    %484 = vst [vmem:[#allocation4 + $0x38] sm:$0xff] %v468
    %485 = vst [vmem:[#allocation4 + $0x40] sm:$0xff] %v469
    %486 = vst [vmem:[#allocation4 + $0x48] sm:$0xff] %v470
    %487 = vst [vmem:[#allocation4 + $0x50] sm:$0xff] %v471
    %488 = vst [vmem:[#allocation4 + $0x58] sm:$0xff] %v472
    %489 = vst [vmem:[#allocation4 + $0x60] sm:$0xff] %v473
    %490 = vst [vmem:[#allocation4 + $0x68] sm:$0xff] %v474
    %491 = vst [vmem:[#allocation4 + $0x70] sm:$0xff] %v475
    %492 = vst [vmem:[#allocation4 + $0x78] sm:$0xff] %v476
    // Predicated region
    $region30: #{tpu_custom_call.1} parent=1 // pred_check
      _
    $region31: #{tpu_custom_call.1} parent=1 // pred_check_branch
      %494 = sbr.rel (0) target = $region33
    $region32: #{tpu_custom_call.1} parent=1 // pred_region
      %s496 = ssub.s32 2048, 2048
      %497 = vsyncadd [#allocation3], %s496
      %s498 = sshll.u32 [#allocation2], 4
      %s499 = int_to_ptr.vmem [resolvable:$true] %s498
      %504 = dma.vmem_to_hbm [thread:$0]  %s499, 2048, %s7, [#allocation3], 128, 128, 8
    $region33: #{tpu_custom_call.1} parent=1 // pred_fallthru
      _
    // Predicated region
    $region34: #{tpu_custom_call.1} parent=1 // pred_check
      _
    $region35: #{tpu_custom_call.1} parent=1 // pred_check_branch
      %506 = sbr.rel (0) target = $region37
    $region36: #{tpu_custom_call.1} parent=1 // pred_region
      %s508 = ssub.s32 2048, 2048
      %509 = vsyncadd [#allocation5], %s508
      %s510 = sshll.u32 [#allocation4], 4
      %s511 = int_to_ptr.vmem [resolvable:$true] %s510
      %516 = dma.vmem_to_hbm [thread:$0]  %s511, 2048, %s8, [#allocation5], 128, 128, 8
    $region37: #{tpu_custom_call.1} parent=1 // pred_fallthru
      _
    // Predicated region
    $region38: #{tpu_custom_call.1} parent=1 // pred_check
      _
    $region39: #{tpu_custom_call.1} parent=1 // pred_check_branch
      %518 = sbr.rel (0) target = $region41
    $region40: #{tpu_custom_call.1} parent=1 // pred_region
      %519 = dma.done [#allocation3], 2048
    $region41: #{tpu_custom_call.1} parent=1 // pred_fallthru
      _
    // Predicated region
    $region42: #{tpu_custom_call.1} parent=1 // pred_check
      _
    $region43: #{tpu_custom_call.1} parent=1 // pred_check_branch
      %521 = sbr.rel (0) target = $region45
    $region44: #{tpu_custom_call.1} parent=1 // pred_region
      %522 = dma.done [#allocation5], 2048
    $region45: #{tpu_custom_call.1} parent=1 // pred_fallthru
      _
    %523 = vsyncpa [#allocation3], 1
    %524 = vsyncpa [#allocation5], 1

</llo_original>
